<compile_context>
chip_gen: v7x
topology: tpu7x:2x2x1
jax: 0.10.0
libtpu: 0.0.40
codegen_flags: <defaults>
</compile_context>

<pallas_src>
import math

import jax
import jax.numpy as jnp
from jax import lax
from jax.experimental import pallas as pl
from jax.experimental.pallas import tpu as pltpu


def _round_up(value, multiple):
    return (value + multiple - 1) // multiple * multiple


# ---------------------------------------------------------------------------
# Kernel 1: h = summary @ W   (small MXU matmul)
# ---------------------------------------------------------------------------
def _project_single_kernel(s_ref, w_ref, h_ref):
    h_ref[...] = jnp.dot(s_ref[...], w_ref[...],
                         preferred_element_type=jnp.float32)


def _project_tiled_kernel(s_ref, w_ref, h_ref):
    @pl.when(pl.program_id(0) == 0)
    def _init():
        h_ref[...] = jnp.zeros_like(h_ref)

    h_ref[...] += jnp.dot(s_ref[...], w_ref[...],
                          preferred_element_type=jnp.float32)


def _project_summary(summary_2d, weight):
    """summary_2d: (1, H), weight: (H, H)  ->  h: (1, H) float32."""
    h_dim = summary_2d.shape[1]
    itemsize = jnp.dtype(weight.dtype).itemsize

    if h_dim * h_dim * itemsize <= 8 * 1024 * 1024:
        # Whole (1,H) x (H,H) product fits comfortably in VMEM: single block,
        # no grid, no per-step overhead, no resident-accumulator RMW.
        return pl.pallas_call(
            _project_single_kernel,
            out_shape=jax.ShapeDtypeStruct((1, h_dim), jnp.float32),
        )(summary_2d, weight)

    # Huge H: stream weight row-panels with a K-tiled f32 accumulator.  Padding
    # the K axis here touches only O(H^2) weight bytes (negligible vs. the N*H
    # x stream) and keeps every K tile full.
    tk = max(128, min(1024,
                      (12 * 1024 * 1024 // (2 * h_dim * itemsize)) // 128 * 128))
    kp = _round_up(h_dim, tk)
    if kp != h_dim:
        summary_2d = jnp.pad(summary_2d, ((0, 0), (0, kp - h_dim)))
        weight = jnp.pad(weight, ((0, kp - h_dim), (0, 0)))
    return pl.pallas_call(
        _project_tiled_kernel,
        out_shape=jax.ShapeDtypeStruct((1, h_dim), jnp.float32),
        grid=(kp // tk,),
        in_specs=[
            pl.BlockSpec((1, tk), lambda k: (0, k)),      # summary K-slice
            pl.BlockSpec((tk, h_dim), lambda k: (k, 0)),  # weight row-panel
        ],
        out_specs=pl.BlockSpec((1, h_dim), lambda k: (0, 0)),  # resident acc
        compiler_params=pltpu.CompilerParams(
            dimension_semantics=("arbitrary",),
            vmem_limit_bytes=32 * 1024 * 1024),
    )(summary_2d, weight)


# ---------------------------------------------------------------------------
# Kernel 2: out[i] = sum_k x[i, k] * h[k]   (HBM-bound x stream, MXU contract)
# ---------------------------------------------------------------------------
def _score_kernel(h_ref, x_ref, o_ref):
    # (1, H) . (TM, H)^T on the MXU -> (1, TM): f32 accumulation, lane-dense
    # store, no f32 materialization of the streamed tile, and the VPU/XLU stay
    # off the critical path so HBM remains the bottleneck on every generation.
    o_ref[...] = lax.dot_general(
        h_ref[...], x_ref[...],
        dimension_numbers=(((1,), (1,)), ((), ())),
        preferred_element_type=jnp.float32,
    ).astype(o_ref.dtype)


def discriminator_forward(x, summary, weight, *, max_block_rows=1024):
    """x: (N, H), summary: (H,) or (1, H), weight: (H, H)  ->  (N,) float32."""
    n_rows, h_dim = x.shape
    summary_2d = summary.reshape(1, h_dim)

    # h = summary @ W, computed once, off the streamed path.  Kept in the
    # stream dtype so a bf16 x tile is consumed by the MXU directly.
    h = _project_summary(summary_2d, weight).astype(x.dtype)

    itemsize = jnp.dtype(x.dtype).itemsize

    # Row tile: multiple of 128 (lane-dense output blocks), capped so the two
    # in-flight x tiles stay under ~24 MiB of scoped VMEM on every generation
    # (v7x only has 64 MiB physical VMEM).
    budget = 24 * 1024 * 1024
    cap_rows = max(128, (budget // (2 * h_dim * itemsize)) // 128 * 128)
    tm_cap = max(128, min(_round_up(max_block_rows, 128), cap_rows))

    # >= 2 grid steps whenever N allows it (megacore split across both
    # TensorCores on v7x) while keeping wasted rows in the last tile < 128.
    steps = max(1, pl.cdiv(n_rows, tm_cap))
    if steps == 1 and n_rows > 128:
        steps = 2
    tm = min(tm_cap, max(128, _round_up(pl.cdiv(n_rows, steps), 128)))
    grid = pl.cdiv(n_rows, tm)
    n_slab = grid * tm   # lane-dense output slab; garbage tail sliced off below

    # x is streamed as-is (no jnp.pad copy).  The partial last tile's
    # out-of-bounds rows only produce garbage in output lanes >= n_rows.
    est = 2 * tm * h_dim * itemsize + 4 * h_dim + 8 * tm
    vmem_limit = int(min(48 * 1024 * 1024,
                         max(16 * 1024 * 1024, 2 * est + (2 << 20))))
    # TODO(synk): for H so large that even a 128-row double-buffered tile
    # exceeds ~48 MiB (H > ~45K in f32), add a second "arbitrary" grid axis
    # tiling H with a partial-sum accumulator.

    out = pl.pallas_call(
        _score_kernel,
        out_shape=jax.ShapeDtypeStruct((1, n_slab), jnp.float32),
        grid=(grid,),
        in_specs=[
            pl.BlockSpec((1, h_dim), lambda i: (0, 0)),   # h: loaded once, resident
            pl.BlockSpec((tm, h_dim), lambda i: (i, 0)),  # x: pipelined stream
        ],
        out_specs=pl.BlockSpec((1, tm), lambda i: (0, i)),  # lane-dense per-tile out
        compiler_params=pltpu.CompilerParams(
            dimension_semantics=("parallel",),              # megacore split on v7x
            vmem_limit_bytes=vmem_limit),
    )(h, x)

    return out[0, :n_rows]


def init_discriminator_weight(key, hidden_size, dtype=jnp.float32):
    # xavier_uniform_ with gain = 1/sqrt(hidden_size):
    #   bound = gain * sqrt(6 / (fan_in + fan_out))
    gain = 1.0 / math.sqrt(hidden_size)
    bound = gain * math.sqrt(6.0 / (hidden_size + hidden_size))
    return jax.random.uniform(
        key, (hidden_size, hidden_size), dtype=dtype, minval=-bound, maxval=bound
    )


if __name__ == "__main__":
    N = 1000      # nodes; not a multiple of the row tile -> exercises the partial tile
    hidden = 96   # hidden_size; not a multiple of 128 -> exercises unpadded-H blocks

    key = jax.random.PRNGKey(0)
    k_w, k_x, k_s = jax.random.split(key, 3)

    weight = init_discriminator_weight(k_w, hidden)
    x = jax.random.normal(k_x, (N, hidden), dtype=jnp.float32)
    summary = jax.random.normal(k_s, (hidden,), dtype=jnp.float32)

    # f32 run with a small row tile -> 4-step pipelined grid, partial last tile.
    out = jax.block_until_ready(
        discriminator_forward(x, summary, weight, max_block_rows=256))
    ref = jnp.sum(x * (summary @ weight), axis=1)
    assert out.shape == (N,)
    assert jnp.allclose(out, ref, atol=5e-3, rtol=5e-3), float(
        jnp.max(jnp.abs(out - ref)))

    # bf16 streaming run (halves HBM bytes on the bandwidth-bound stream);
    # accumulation inside the kernels stays f32.
    x_bf = x.astype(jnp.bfloat16)
    s_bf = summary.astype(jnp.bfloat16)
    w_bf = weight.astype(jnp.bfloat16)
    out_bf = jax.block_until_ready(discriminator_forward(x_bf, s_bf, w_bf))
    ref_bf = jnp.sum(
        x_bf.astype(jnp.float32)
        * (s_bf.astype(jnp.float32) @ w_bf.astype(jnp.float32)),
        axis=1)
    assert out_bf.shape == (N,)
    assert jnp.allclose(out_bf, ref_bf, atol=5e-2, rtol=5e-2), float(
        jnp.max(jnp.abs(out_bf - ref_bf)))

    print("KERNEL_OK")
</pallas_src>

<mosaic_0001>
module attributes {stable_mosaic.version = 11 : i64} {
  func.func @_project_single_kernel(%arg0: memref<1x96xf32, #tpu.memory_space<vmem>>, %arg1: memref<96x96xf32, #tpu.memory_space<vmem>>, %arg2: memref<1x96xf32, #tpu.memory_space<vmem>>) attributes {dimension_semantics = [], scalar_prefetch = 0 : i64, scratch_operands = 0 : i64, tpu.core_type = #tpu.core_type<tc>} {
    %c0 = arith.constant 0 : index
    %c0_0 = arith.constant 0 : index
    %0 = vector.load %arg0[%c0, %c0_0] : memref<1x96xf32, #tpu.memory_space<vmem>>, vector<1x96xf32>
    %c0_1 = arith.constant 0 : index
    %c0_2 = arith.constant 0 : index
    %1 = vector.load %arg1[%c0_1, %c0_2] : memref<96x96xf32, #tpu.memory_space<vmem>>, vector<96x96xf32>
    %cst = arith.constant dense<0.000000e+00> : vector<1x96xf32>
    %2 = tpu.matmul %0, %1, %cst {dimension_numbers = #tpu.dot_dimension_numbers<[1], [0], [0], [1], [0, 0, 1, 1], [], []>} : vector<1x96xf32>, vector<96x96xf32>, vector<1x96xf32> -> vector<1x96xf32>
    %c0_3 = arith.constant 0 : index
    %c0_4 = arith.constant 0 : index
    %3 = vector.load %arg2[%c0_3, %c0_4] : memref<1x96xf32, #tpu.memory_space<vmem>>, vector<1x96xf32>
    tpu.vector_store %arg2[%c0_3, %c0_4], %2 {strides = array<i32>} : memref<1x96xf32, #tpu.memory_space<vmem>>, vector<1x96xf32>,
    return
  }
}

</mosaic_0001>

<llo_original>
// kernel: tpu_custom_call.1
$region0: #{tpu_custom_call.1}
  #allocation0 [shape = 'u32[]', space=smem, size = 0x4, offset = 0x4, fixed_abs, tag = 'smem constant byte address 0x4 - core index']
  #allocation1 [shape = 'u32[144,128]{1,0:T(1,128)}', space=vmem, size = 0x12000, scoped, tag = 'internal scratch']
  %s0 = inlined_call_operand.hbm [shape: f32[1,96], index: 0, kind: input, shape index: {}]
  %s1 = inlined_call_operand.hbm [shape: f32[96,96], index: 1, kind: input, shape index: {}]
  %s2 = inlined_call_operand.hbm [shape: f32[1,96], index: 2, kind: output, shape index: {}]
  %s3 = sld [smem:[#allocation0]]
  $region26: #{tpu_custom_call.1} parent=0
    _
  %s5 = ssub.s32 1, %s3
  %s6 = scalar_select 0, %s5, %s3
  $region1: #{tpu_custom_call.1} parent=0
    #allocation2 [shape = 'u8[512]{0}', space=vmem, size = 0x400, scoped, tag = 'input window, operand 0, single buffered']
    #allocation3 [shape = 's32[1]{0}', space=sflag, size = 0x4, scoped, tag = 'scoped memory for tpu_custom_call.1']
    #allocation4 [shape = 's32[1]{0}', space=sflag, size = 0x4, scoped, tag = 'scoped memory for tpu_custom_call.1']
    #allocation5 [shape = 'u8[49152]{0}', space=vmem, size = 0xc000, scoped, tag = 'input window, operand 1, single buffered']
    #allocation6 [shape = 's32[1]{0}', space=sflag, size = 0x4, scoped, tag = 'scoped memory for tpu_custom_call.1']
    #allocation7 [shape = 'u8[512]{0}', space=vmem, size = 0x400, scoped, tag = 'output window, operand 0, single buffered']
    %7 = vsyncpa [#allocation3], 0
    %8 = vsyncpa [#allocation6], 0
    %9 = vsyncpa [#allocation4], 0
    // Predicated region
    $region2: #{tpu_custom_call.1} parent=1 // pred_check
      _
    $region3: #{tpu_custom_call.1} parent=1 // pred_check_branch
      %11 = sbr.rel (0) target = $region5
    $region4: #{tpu_custom_call.1} parent=1 // pred_region
      %s13 = ssub.s32 16, 16
      %14 = vsyncadd [#allocation3], %s13
      %s16 = sshll.u32 [#allocation2], 4
      %s17 = int_to_ptr.vmem [resolvable:$true] %s16
      %19 = dma.hbm_to_vmem [thread:$0]  %s0, 16, %s17, [#allocation3]
    $region5: #{tpu_custom_call.1} parent=1 // pred_fallthru
      _
    // Predicated region
    $region6: #{tpu_custom_call.1} parent=1 // pred_check
      _
    $region7: #{tpu_custom_call.1} parent=1 // pred_check_branch
      %21 = sbr.rel (0) target = $region9
    $region8: #{tpu_custom_call.1} parent=1 // pred_region
      %s23 = ssub.s32 1536, 1536
      %24 = vsyncadd [#allocation6], %s23
      %s25 = sshll.u32 [#allocation5], 4
      %s26 = int_to_ptr.vmem [resolvable:$true] %s25
      %31 = dma.hbm_to_vmem [thread:$0]  %s1, 1536, %s26, [#allocation6], 128, 128, 8
    $region9: #{tpu_custom_call.1} parent=1 // pred_fallthru
      _
    // Predicated region
    $region10: #{tpu_custom_call.1} parent=1 // pred_check
      _
    $region11: #{tpu_custom_call.1} parent=1 // pred_check_branch
      %33 = sbr.rel (0) target = $region13
    $region12: #{tpu_custom_call.1} parent=1 // pred_region
      %34 = dma.done [#allocation3], 16
    $region13: #{tpu_custom_call.1} parent=1 // pred_fallthru
      _
    // Predicated region
    $region14: #{tpu_custom_call.1} parent=1 // pred_check
      _
    $region15: #{tpu_custom_call.1} parent=1 // pred_check_branch
      %36 = sbr.rel (0) target = $region17
    $region16: #{tpu_custom_call.1} parent=1 // pred_region
      %37 = dma.done [#allocation6], 1536
    $region17: #{tpu_custom_call.1} parent=1 // pred_fallthru
      _
    %v38 = vld [vmem:[#allocation2] sm:$0x1]
    %v39 = vld [vmem:[#allocation5] sm:$0xff]
    %v40 = vld [vmem:[#allocation5 + $0x8] sm:$0xff]
    %v41 = vld [vmem:[#allocation5 + $0x10] sm:$0xff]
    %v42 = vld [vmem:[#allocation5 + $0x18] sm:$0xff]
    %v43 = vld [vmem:[#allocation5 + $0x20] sm:$0xff]
    %v44 = vld [vmem:[#allocation5 + $0x28] sm:$0xff]
    %v45 = vld [vmem:[#allocation5 + $0x30] sm:$0xff]
    %v46 = vld [vmem:[#allocation5 + $0x38] sm:$0xff]
    %v47 = vld [vmem:[#allocation5 + $0x40] sm:$0xff]
    %v48 = vld [vmem:[#allocation5 + $0x48] sm:$0xff]
    %v49 = vld [vmem:[#allocation5 + $0x50] sm:$0xff]
    %v50 = vld [vmem:[#allocation5 + $0x58] sm:$0xff]
    %vm51 = vcmask 785408
    %v53 = vsel %vm51, %v38, 0
    %55 = vmatprep.subr.mxu0 0.0
    %56 = vmatpush1.msra.mxu0 %v39
    %57 = vmatprep.subr.mxu0 0.0
    %58 = vmatpush1.msra.mxu0 %v40
    %59 = vmatprep.subr.mxu0 0.0
    %60 = vmatpush1.msra.mxu0 %v41
    %61 = vmatprep.subr.mxu0 0.0
    %62 = vmatpush1.msra.mxu0 %v42
    %63 = vmatprep.subr.mxu0 0.0
    %64 = vmatpush1.msra.mxu0 %v43
    %65 = vmatprep.subr.mxu0 0.0
    %66 = vmatpush1.msra.mxu0 %v44
    %67 = vmatprep.subr.mxu0 0.0
    %68 = vmatpush1.msra.mxu0 %v45
    %69 = vmatprep.subr.mxu0 0.0
    %70 = vmatpush1.msra.mxu0 %v46
    %71 = vmatprep.subr.mxu0 0.0
    %72 = vmatpush1.msra.mxu0 %v47
    %73 = vmatprep.subr.mxu0 0.0
    %74 = vmatpush1.msra.mxu0 %v48
    %75 = vmatprep.subr.mxu0 0.0
    %76 = vmatpush1.msra.mxu0 %v49
    %77 = vmatprep.subr.mxu0 0.0
    %78 = vmatpush1.msra.mxu0 %v50
    %79 = vmatprep.subr.mxu0 0.0
    %80 = vmatpush1.msra.mxu0 0.0
    %81 = vmatprep.subr.mxu0 0.0
    %82 = vmatpush1.msra.mxu0 0.0
    %83 = vmatprep.subr.mxu0 0.0
    %84 = vmatpush1.msra.mxu0 0.0
    %85 = vmatprep.subr.mxu0 0.0
    %86 = vmatpush1.msra.mxu0 0.0
    %87 = vmatprep.subr.mxu0 0.0
    %88 = vmatpush1.msra.mxu0 0.0
    %89 = vmatprep.subr.mxu0 0.0
    %90 = vmatpush1.msra.mxu0 0.0
    %91 = vmatprep.subr.mxu0 0.0
    %92 = vmatpush1.msra.mxu0 0.0
    %93 = vmatprep.subr.mxu0 0.0
    %94 = vmatpush1.msra.mxu0 0.0
    %95 = vmatprep.subr.mxu0 0.0
    %96 = vmatpush1.msra.mxu0 0.0
    %97 = vmatprep.subr.mxu0 0.0
    %98 = vmatpush1.msra.mxu0 0.0
    %99 = vmatprep.subr.mxu0 0.0
    %100 = vmatpush1.msra.mxu0 0.0
    %101 = vmatprep.subr.mxu0 0.0
    %102 = vmatpush1.msra.mxu0 0.0
    %103 = vmatprep.subr.mxu0 0.0
    %104 = vmatpush1.msra.mxu0 0.0
    %105 = vmatprep.subr.mxu0 0.0
    %106 = vmatpush1.msra.mxu0 0.0
    %107 = vmatprep.subr.mxu0 0.0
    %108 = vmatpush1.msra.mxu0 0.0
    %109 = vmatprep.subr.mxu0 0.0
    %110 = vmatpush1.msra.mxu0 0.0
    %111 = vmatprep.subr.mxu0 0.0
    %112 = vmatpush1.msra.mxu0 0.0
    %113 = vmatprep.subr.mxu0 0.0
    %114 = vmatpush1.msra.mxu0 0.0
    %115 = vmatprep.subr.mxu0 0.0
    %116 = vmatpush1.msra.mxu0 0.0
    %117 = vmatprep.subr.mxu0 0.0
    %118 = vmatpush1.msra.mxu0 0.0
    %119 = vmatprep.mubr.f32.mxu0 0.0
    %120 = vmatmul.mubr.f32.gmra.mrb[0].mxu0 %v53
    %v121 = vpop.f32.mrb[0].mxu0
    %v122 = vadd.f32 0.0, %v121
    %v123 = vpop.f32.mrb[0].mxu0
    %124 = vdwg.mxu0
    %vm125 = vcmask 778240
    %126 = vst.msk [vmem:[#allocation7] sm:$0x1] %vm125, %v122
    // Predicated region
    $region18: #{tpu_custom_call.1} parent=1 // pred_check
      _
    $region19: #{tpu_custom_call.1} parent=1 // pred_check_branch
      %128 = sbr.rel (0) target = $region21
    $region20: #{tpu_custom_call.1} parent=1 // pred_region
      %s130 = ssub.s32 16, 16
      %131 = vsyncadd [#allocation4], %s130
      %s133 = sshll.u32 [#allocation7], 4
      %s134 = int_to_ptr.vmem [resolvable:$true] %s133
      %136 = dma.vmem_to_hbm [thread:$0]  %s134, 16, %s2, [#allocation4]
    $region21: #{tpu_custom_call.1} parent=1 // pred_fallthru
      _
    // Predicated region
    $region22: #{tpu_custom_call.1} parent=1 // pred_check
      _
    $region23: #{tpu_custom_call.1} parent=1 // pred_check_branch
      %138 = sbr.rel (0) target = $region25
    $region24: #{tpu_custom_call.1} parent=1 // pred_region
      %139 = dma.done [#allocation4], 16
    $region25: #{tpu_custom_call.1} parent=1 // pred_fallthru
      _
    %140 = vsyncpa [#allocation3], 1
    %141 = vsyncpa [#allocation6], 1
    %142 = vsyncpa [#allocation4], 1

</llo_original>
